<compile_context>
chip_gen: v7x
topology: tpu7x:2x2x1
jax: 0.10.0
libtpu: 0.0.40
codegen_flags: <defaults>
</compile_context>

<pallas_src>
import functools

import jax
import jax.numpy as jnp
from jax.experimental import pallas as pl
from jax.experimental.pallas import tpu as pltpu


def _mlp_gen_kernel(x_ref, g_ref, w1_ref, b1_ref, w2_ref, b2_ref, w3_ref, b3_ref,
                    sample_ref, probs_ref, logsample_ref):
    # --- 3-layer MLP: bf16 MXU matmuls, f32 accumulation, f32 bias add + relu ---
    x = x_ref[...].astype(jnp.bfloat16)
    h1 = jnp.dot(x, w1_ref[...], preferred_element_type=jnp.float32) + b1_ref[...]
    h1 = jnp.maximum(h1, 0.0).astype(jnp.bfloat16)
    h2 = jnp.dot(h1, w2_ref[...], preferred_element_type=jnp.float32) + b2_ref[...]
    h2 = jnp.maximum(h2, 0.0).astype(jnp.bfloat16)
    a1 = jnp.dot(h2, w3_ref[...], preferred_element_type=jnp.float32) + b3_ref[...]

    # --- softmax epilogue, reusing exp(z) (single exp per element, single log per row) ---
    m = jnp.max(a1, axis=-1, keepdims=True)
    z = a1 - m                                   # shifted logits
    e = jnp.exp(z)
    s = jnp.sum(e, axis=-1, keepdims=True)
    probs_ref[...] = e / s                       # == softmax(a1) == LogSoftmax(a1).exp()

    # --- Gumbel-max categorical sampling (noise precomputed in the wrapper) ---
    # argmax(log_pi + g) == argmax(z + g): the per-row log-sum-exp is constant.
    score = z + g_ref[...]
    tn, c = score.shape
    col = jax.lax.broadcasted_iota(jnp.int32, (tn, c), 1)
    best = jnp.max(score, axis=-1, keepdims=True)
    idx = jnp.min(jnp.where(score >= best, col, c), axis=-1, keepdims=True)  # (tn, 1)
    sample_ref[...] = idx                        # note: (N,1) store is lane-sparse; fine at these N

    # log_prob of the sampled class: z[idx] - log(sum(e))
    z_sel = jnp.sum(jnp.where(col == idx, z, 0.0), axis=-1, keepdims=True)
    logsample_ref[...] = z_sel - jnp.log(s)


def _round_up(v, m):
    return (v + m - 1) // m * m


@functools.partial(jax.jit, static_argnames=("cluster_num", "tile_n"))
def mlp_gen_policy_forward(x, params, key, *, cluster_num, tile_n=512):
    """x: (B, S, input_dim) f32. Returns (sample (B,S) i32, probs (B,S,C) f32, log_sample (B,S,1) f32)."""
    b, s, d_in = x.shape
    n = b * s
    c = cluster_num

    w1, b1, w2, b2, w3, b3 = params
    hidden = w1.shape[1]

    # Row tiling: sublane granularity is 8; pad N so the grid divides evenly.
    tile_n = max(8, min(_round_up(tile_n, 8), _round_up(n, 8)))
    n_pad = _round_up(n, tile_n)
    num_tiles = n_pad // tile_n

    x2 = x.reshape(n, d_in)
    if n_pad != n:
        x2 = jnp.pad(x2, ((0, n_pad - n), (0, 0)))

    # Pre-sampled Gumbel noise (replaces the torch Categorical RNG; same distribution).
    g = jax.random.gumbel(key, (n_pad, c), jnp.float32)

    # bf16 weights for full-rate MXU; biases stay f32 (added after f32 accumulation).
    w1b, w2b, w3b = (w.astype(jnp.bfloat16) for w in (w1, w2, w3))

    def row_spec(width):
        return pl.BlockSpec((tile_n, width), lambda i: (i, 0))

    def const_spec(shape):
        return pl.BlockSpec(shape, lambda i: (0, 0))     # resident across grid steps

    out_shapes = (
        jax.ShapeDtypeStruct((n_pad, 1), jnp.int32),       # sampled class index
        jax.ShapeDtypeStruct((n_pad, c), jnp.float32),     # probs ("logits" in the torch code)
        jax.ShapeDtypeStruct((n_pad, 1), jnp.float32),     # log_prob of the sample
    )

    sample2, probs2, logsample2 = pl.pallas_call(
        _mlp_gen_kernel,
        grid=(num_tiles,),
        in_specs=[
            row_spec(d_in),                                # x tile
            row_spec(c),                                   # gumbel noise tile
            const_spec((d_in, hidden)), const_spec((1, hidden)),
            const_spec((hidden, hidden)), const_spec((1, hidden)),
            const_spec((hidden, c)), const_spec((1, c)),
        ],
        out_specs=(row_spec(1), row_spec(c), row_spec(1)),
        out_shape=out_shapes,
        compiler_params=pltpu.CompilerParams(
            dimension_semantics=("parallel",),             # row tiles independent (v7x: 2 TCs)
            vmem_limit_bytes=64 * 1024 * 1024,             # re-derive tile_n per generation (v7x: 64 MiB VMEM)
        ),
    )(x2, g, w1b, b1, w2b, b2, w3b, b3)

    sample_groups = sample2[:n, 0].reshape(b, s)
    logits = probs2[:n].reshape(b, s, c)
    log_sample = logsample2[:n].reshape(b, s, 1)
    return sample_groups, logits, log_sample


def init_params(key, input_dim, hidden_dim, cluster_num):
    """Deterministic param init. Weights stored (in, out); biases stored (1, out)."""
    k1, k2, k3, k4, k5, k6 = jax.random.split(key, 6)
    scale = 0.1
    w1 = scale * jax.random.normal(k1, (input_dim, hidden_dim), jnp.float32)
    b1 = scale * jax.random.normal(k2, (1, hidden_dim), jnp.float32)
    w2 = scale * jax.random.normal(k3, (hidden_dim, hidden_dim), jnp.float32)
    b2 = scale * jax.random.normal(k4, (1, hidden_dim), jnp.float32)
    w3 = scale * jax.random.normal(k5, (hidden_dim, cluster_num), jnp.float32)
    b3 = scale * jax.random.normal(k6, (1, cluster_num), jnp.float32)
    return (w1, b1, w2, b2, w3, b3)


if __name__ == "__main__":
    B, S = 2, 8
    input_dim, hidden_dim, cluster_num = 16, 32, 8

    root = jax.random.PRNGKey(0)
    kx, kp, ks = jax.random.split(root, 3)
    x = jax.random.normal(kx, (B, S, input_dim), jnp.float32)
    params = init_params(kp, input_dim, hidden_dim, cluster_num)

    # tile_n=8 at this size -> 2 grid steps (exercises the tiled / pipelined path).
    sample_groups, logits, log_sample = mlp_gen_policy_forward(
        x, params, ks, cluster_num=cluster_num, tile_n=8)
    jax.block_until_ready((sample_groups, logits, log_sample))

    # --- reference checks (same bf16-in / f32-accumulate precision as the kernel) ---
    w1, b1, w2, b2, w3, b3 = params
    bf = jnp.bfloat16
    x2 = x.reshape(-1, input_dim)
    h1 = jax.nn.relu(jnp.dot(x2.astype(bf), w1.astype(bf),
                             preferred_element_type=jnp.float32) + b1)
    h2 = jax.nn.relu(jnp.dot(h1.astype(bf), w2.astype(bf),
                             preferred_element_type=jnp.float32) + b2)
    a1 = jnp.dot(h2.astype(bf), w3.astype(bf), preferred_element_type=jnp.float32) + b3
    probs_ref = jax.nn.softmax(a1, axis=-1).reshape(B, S, cluster_num)

    assert sample_groups.shape == (B, S)
    assert logits.shape == (B, S, cluster_num)
    assert log_sample.shape == (B, S, 1)
    assert jnp.allclose(logits, probs_ref, atol=1e-4), "probs mismatch"
    assert jnp.all((sample_groups >= 0) & (sample_groups < cluster_num)), "sample out of range"

    gathered = jnp.take_along_axis(jnp.log(logits), sample_groups[..., None], axis=-1)
    assert jnp.allclose(log_sample, gathered, atol=1e-4), "log_prob mismatch"

    # Sampled index must maximize (log_pi + gumbel) for the same noise the kernel used.
    g = jax.random.gumbel(ks, (B * S, cluster_num), jnp.float32)   # n_pad == n at this size
    score_ref = jnp.log(probs_ref.reshape(-1, cluster_num)) + g
    picked = jnp.take_along_axis(score_ref, sample_groups.reshape(-1, 1), axis=-1)[:, 0]
    assert jnp.allclose(picked, score_ref.max(axis=-1), atol=1e-4), "sample is not the Gumbel-max"

    print("KERNEL_OK")
</pallas_src>

<mosaic_0001>
module attributes {stable_mosaic.version = 11 : i64} {
  func.func @_mlp_gen_kernel(%arg0: i32, %arg1: memref<8x16xf32, #tpu.memory_space<vmem>>, %arg2: memref<8x8xf32, #tpu.memory_space<vmem>>, %arg3: memref<16x32xbf16, #tpu.memory_space<vmem>>, %arg4: memref<1x32xf32, #tpu.memory_space<vmem>>, %arg5: memref<32x32xbf16, #tpu.memory_space<vmem>>, %arg6: memref<1x32xf32, #tpu.memory_space<vmem>>, %arg7: memref<32x8xbf16, #tpu.memory_space<vmem>>, %arg8: memref<1x8xf32, #tpu.memory_space<vmem>>, %arg9: memref<8x1xi32, #tpu.memory_space<vmem>>, %arg10: memref<8x8xf32, #tpu.memory_space<vmem>>, %arg11: memref<8x1xf32, #tpu.memory_space<vmem>>) attributes {dimension_semantics = [#tpu.dimension_semantics<parallel>], iteration_bounds = array<i64: 2>, scalar_prefetch = 0 : i64, scratch_operands = 0 : i64, tpu.core_type = #tpu.core_type<tc>, window_params = [{transform_indices = @transform_0, window_bounds = array<i64: 8, 16>}, {transform_indices = @transform_1, window_bounds = array<i64: 8, 8>}, {pipeline_mode = #tpu.pipeline_mode<synchronous>, transform_indices = @transform_2, window_bounds = array<i64: 16, 32>}, {pipeline_mode = #tpu.pipeline_mode<synchronous>, transform_indices = @transform_3, window_bounds = array<i64: 1, 32>}, {pipeline_mode = #tpu.pipeline_mode<synchronous>, transform_indices = @transform_4, window_bounds = array<i64: 32, 32>}, {pipeline_mode = #tpu.pipeline_mode<synchronous>, transform_indices = @transform_5, window_bounds = array<i64: 1, 32>}, {pipeline_mode = #tpu.pipeline_mode<synchronous>, transform_indices = @transform_6, window_bounds = array<i64: 32, 8>}, {pipeline_mode = #tpu.pipeline_mode<synchronous>, transform_indices = @transform_7, window_bounds = array<i64: 1, 8>}, {transform_indices = @transform_8, window_bounds = array<i64: 8, 1>}, {transform_indices = @transform_9, window_bounds = array<i64: 8, 8>}, {transform_indices = @transform_10, window_bounds = array<i64: 8, 1>}]} {
    %c0 = arith.constant 0 : index
    %c0_0 = arith.constant 0 : index
    %0 = vector.load %arg1[%c0, %c0_0] : memref<8x16xf32, #tpu.memory_space<vmem>>, vector<8x16xf32>
    %1 = arith.truncf %0 : vector<8x16xf32> to vector<8x16xbf16>
    %c0_1 = arith.constant 0 : index
    %c0_2 = arith.constant 0 : index
    %2 = vector.load %arg3[%c0_1, %c0_2] : memref<16x32xbf16, #tpu.memory_space<vmem>>, vector<16x32xbf16>
    %cst = arith.constant dense<0.000000e+00> : vector<8x32xf32>
    %3 = tpu.matmul %1, %2, %cst {dimension_numbers = #tpu.dot_dimension_numbers<[1], [0], [0], [1], [0, 0, 1, 1], [], []>} : vector<8x16xbf16>, vector<16x32xbf16>, vector<8x32xf32> -> vector<8x32xf32>
    %c0_3 = arith.constant 0 : index
    %c0_4 = arith.constant 0 : index
    %4 = vector.load %arg4[%c0_3, %c0_4] : memref<1x32xf32, #tpu.memory_space<vmem>>, vector<1x32xf32>
    %5 = vector.broadcast %4 : vector<1x32xf32> to vector<8x32xf32>
    %6 = arith.addf %3, %5 : vector<8x32xf32>
    %cst_5 = arith.constant 0.000000e+00 : f32
    %7 = vector.broadcast %cst_5 : f32 to vector<8x32xf32>
    %8 = arith.maximumf %6, %7 : vector<8x32xf32>
    %9 = arith.truncf %8 : vector<8x32xf32> to vector<8x32xbf16>
    %c0_6 = arith.constant 0 : index
    %c0_7 = arith.constant 0 : index
    %10 = vector.load %arg5[%c0_6, %c0_7] : memref<32x32xbf16, #tpu.memory_space<vmem>>, vector<32x32xbf16>
    %cst_8 = arith.constant dense<0.000000e+00> : vector<8x32xf32>
    %11 = tpu.matmul %9, %10, %cst_8 {dimension_numbers = #tpu.dot_dimension_numbers<[1], [0], [0], [1], [0, 0, 1, 1], [], []>} : vector<8x32xbf16>, vector<32x32xbf16>, vector<8x32xf32> -> vector<8x32xf32>
    %c0_9 = arith.constant 0 : index
    %c0_10 = arith.constant 0 : index
    %12 = vector.load %arg6[%c0_9, %c0_10] : memref<1x32xf32, #tpu.memory_space<vmem>>, vector<1x32xf32>
    %13 = vector.broadcast %12 : vector<1x32xf32> to vector<8x32xf32>
    %14 = arith.addf %11, %13 : vector<8x32xf32>
    %cst_11 = arith.constant 0.000000e+00 : f32
    %15 = vector.broadcast %cst_11 : f32 to vector<8x32xf32>
    %16 = arith.maximumf %14, %15 : vector<8x32xf32>
    %17 = arith.truncf %16 : vector<8x32xf32> to vector<8x32xbf16>
    %c0_12 = arith.constant 0 : index
    %c0_13 = arith.constant 0 : index
    %18 = vector.load %arg7[%c0_12, %c0_13] : memref<32x8xbf16, #tpu.memory_space<vmem>>, vector<32x8xbf16>
    %cst_14 = arith.constant dense<0.000000e+00> : vector<8x8xf32>
    %19 = tpu.matmul %17, %18, %cst_14 {dimension_numbers = #tpu.dot_dimension_numbers<[1], [0], [0], [1], [0, 0, 1, 1], [], []>} : vector<8x32xbf16>, vector<32x8xbf16>, vector<8x8xf32> -> vector<8x8xf32>
    %c0_15 = arith.constant 0 : index
    %c0_16 = arith.constant 0 : index
    %20 = vector.load %arg8[%c0_15, %c0_16] : memref<1x8xf32, #tpu.memory_space<vmem>>, vector<1x8xf32>
    %21 = vector.broadcast %20 : vector<1x8xf32> to vector<8x8xf32>
    %22 = arith.addf %19, %21 : vector<8x8xf32>
    %cst_17 = arith.constant dense<0xFF800000> : vector<8xf32>
    %23 = vector.multi_reduction <maximumf>, %22, %cst_17 [1] : vector<8x8xf32> to vector<8xf32>
    %24 = vector.shape_cast %23 : vector<8xf32> to vector<8x1xf32>
    %25 = vector.broadcast %24 : vector<8x1xf32> to vector<8x8xf32>
    %26 = arith.subf %22, %25 : vector<8x8xf32>
    %27 = math.exp %26 : vector<8x8xf32>
    %cst_18 = arith.constant dense<0.000000e+00> : vector<8xf32>
    %28 = vector.multi_reduction <add>, %27, %cst_18 [1] : vector<8x8xf32> to vector<8xf32>
    %29 = vector.shape_cast %28 : vector<8xf32> to vector<8x1xf32>
    %30 = vector.broadcast %29 : vector<8x1xf32> to vector<8x8xf32>
    %31 = arith.divf %27, %30 : vector<8x8xf32>
    %c0_19 = arith.constant 0 : index
    %c0_20 = arith.constant 0 : index
    %32 = vector.load %arg10[%c0_19, %c0_20] : memref<8x8xf32, #tpu.memory_space<vmem>>, vector<8x8xf32>
    tpu.vector_store %arg10[%c0_19, %c0_20], %31 {strides = array<i32>} : memref<8x8xf32, #tpu.memory_space<vmem>>, vector<8x8xf32>,
    %c0_21 = arith.constant 0 : index
    %c0_22 = arith.constant 0 : index
    %33 = vector.load %arg2[%c0_21, %c0_22] : memref<8x8xf32, #tpu.memory_space<vmem>>, vector<8x8xf32>
    %34 = arith.addf %26, %33 : vector<8x8xf32>
    %35 = tpu.iota {dimensions = array<i32: 1>} : vector<8x8xi32>
    %cst_23 = arith.constant dense<0xFF800000> : vector<8xf32>
    %36 = vector.multi_reduction <maximumf>, %34, %cst_23 [1] : vector<8x8xf32> to vector<8xf32>
    %37 = vector.shape_cast %36 : vector<8xf32> to vector<8x1xf32>
    %38 = vector.broadcast %37 : vector<8x1xf32> to vector<8x8xf32>
    %39 = arith.cmpf oge, %34, %38 : vector<8x8xf32>
    %c8_i32 = arith.constant 8 : i32
    %40 = vector.broadcast %c8_i32 : i32 to vector<8x8xi32>
    %41 = arith.select %39, %35, %40 : vector<8x8xi1>, vector<8x8xi32>
    %cst_24 = arith.constant dense<2147483647> : vector<8xi32>
    %42 = vector.multi_reduction <minsi>, %41, %cst_24 [1] : vector<8x8xi32> to vector<8xi32>
    %43 = vector.shape_cast %42 : vector<8xi32> to vector<8x1xi32>
    %c0_25 = arith.constant 0 : index
    %c0_26 = arith.constant 0 : index
    %44 = vector.load %arg9[%c0_25, %c0_26] : memref<8x1xi32, #tpu.memory_space<vmem>>, vector<8x1xi32>
    tpu.vector_store %arg9[%c0_25, %c0_26], %43 {strides = array<i32>} : memref<8x1xi32, #tpu.memory_space<vmem>>, vector<8x1xi32>,
    %45 = vector.broadcast %43 : vector<8x1xi32> to vector<8x8xi32>
    %46 = arith.cmpi eq, %35, %45 : vector<8x8xi32>
    %cst_27 = arith.constant 0.000000e+00 : f32
    %47 = vector.broadcast %cst_27 : f32 to vector<8x8xf32>
    %48 = arith.select %46, %26, %47 : vector<8x8xi1>, vector<8x8xf32>
    %cst_28 = arith.constant dense<0.000000e+00> : vector<8xf32>
    %49 = vector.multi_reduction <add>, %48, %cst_28 [1] : vector<8x8xf32> to vector<8xf32>
    %50 = vector.shape_cast %49 : vector<8xf32> to vector<8x1xf32>
    %51 = math.log %29 : vector<8x1xf32>
    %52 = arith.subf %50, %51 : vector<8x1xf32>
    %c0_29 = arith.constant 0 : index
    %c0_30 = arith.constant 0 : index
    %53 = vector.load %arg11[%c0_29, %c0_30] : memref<8x1xf32, #tpu.memory_space<vmem>>, vector<8x1xf32>
    tpu.vector_store %arg11[%c0_29, %c0_30], %52 {strides = array<i32>} : memref<8x1xf32, #tpu.memory_space<vmem>>, vector<8x1xf32>,
    return
  }
  func.func @transform_0(%arg0: i32) -> (i32, i32) {
    %c0_i32 = arith.constant 0 : i32
    %c0_i32_0 = arith.constant 0 : i32
    return %arg0, %c0_i32 : i32, i32
  }
  func.func @transform_1(%arg0: i32) -> (i32, i32) {
    %c0_i32 = arith.constant 0 : i32
    %c0_i32_0 = arith.constant 0 : i32
    return %arg0, %c0_i32 : i32, i32
  }
  func.func @transform_2(%arg0: i32) -> (i32, i32) {
    %c0_i32 = arith.constant 0 : i32
    %c0_i32_0 = arith.constant 0 : i32
    %c0_i32_1 = arith.constant 0 : i32
    return %c0_i32, %c0_i32_0 : i32, i32
  }
  func.func @transform_3(%arg0: i32) -> (i32, i32) {
    %c0_i32 = arith.constant 0 : i32
    %c0_i32_0 = arith.constant 0 : i32
    %c0_i32_1 = arith.constant 0 : i32
    return %c0_i32, %c0_i32_0 : i32, i32
  }
  func.func @transform_4(%arg0: i32) -> (i32, i32) {
    %c0_i32 = arith.constant 0 : i32
    %c0_i32_0 = arith.constant 0 : i32
    %c0_i32_1 = arith.constant 0 : i32
    return %c0_i32, %c0_i32_0 : i32, i32
  }
  func.func @transform_5(%arg0: i32) -> (i32, i32) {
    %c0_i32 = arith.constant 0 : i32
    %c0_i32_0 = arith.constant 0 : i32
    %c0_i32_1 = arith.constant 0 : i32
    return %c0_i32, %c0_i32_0 : i32, i32
  }
  func.func @transform_6(%arg0: i32) -> (i32, i32) {
    %c0_i32 = arith.constant 0 : i32
    %c0_i32_0 = arith.constant 0 : i32
    %c0_i32_1 = arith.constant 0 : i32
    return %c0_i32, %c0_i32_0 : i32, i32
  }
  func.func @transform_7(%arg0: i32) -> (i32, i32) {
    %c0_i32 = arith.constant 0 : i32
    %c0_i32_0 = arith.constant 0 : i32
    %c0_i32_1 = arith.constant 0 : i32
    return %c0_i32, %c0_i32_0 : i32, i32
  }
  func.func @transform_8(%arg0: i32) -> (i32, i32) {
    %c0_i32 = arith.constant 0 : i32
    %c0_i32_0 = arith.constant 0 : i32
    return %arg0, %c0_i32 : i32, i32
  }
  func.func @transform_9(%arg0: i32) -> (i32, i32) {
    %c0_i32 = arith.constant 0 : i32
    %c0_i32_0 = arith.constant 0 : i32
    return %arg0, %c0_i32 : i32, i32
  }
  func.func @transform_10(%arg0: i32) -> (i32, i32) {
    %c0_i32 = arith.constant 0 : i32
    %c0_i32_0 = arith.constant 0 : i32
    return %arg0, %c0_i32 : i32, i32
  }
}

</mosaic_0001>

<llo_original>
// kernel: squeeze.5
$region0: #{squeeze.5}
  %s0 = inlined_call_operand.vmem [shape: s32[16], index: 0, kind: input, shape index: {}]
  %s1 = inlined_call_operand.hbm [shape: s32[2,8], index: 1, kind: output, shape index: {}]
  $region1: #{squeeze.5} parent=0
    #allocation0 [shape = 'u8[1024]{0}', space=vmem, size = 0x400, scoped, tag = 'operand span for operand 1']
    #allocation1 [shape = 's32[1]{0}', space=sflag, size = 0x4, scoped, tag = 'scoped memory for squeeze.5']
    #allocation2 [shape = 'u8[4096]{0}', space=vmem, size = 0x1000, scoped, tag = 'scoped mem for output reshape']
    #allocation3 [shape = 'u8[4096]{0}', space=vmem, size = 0x1000, scoped, tag = 'scoped mem for input reshape']
    %2 = vsyncpa [#allocation1], 0
    %s4 = sshllo.u32 0, 1
    %v5 = vld [vmem:[%s0] sm:%s4]
    %6 = vst [vmem:[#allocation3] sm:%s4] %v5
    %v7 = vld [vmem:[#allocation3] sm:$0x1]
    %vm8 = vcmask 64512
    %9 = vst.msk [vmem:[#allocation2] sm:$0x1] %vm8, %v7
    %v10 = vld [vmem:[#allocation3] sm:$0x1]
    %11 = vrot.lane.b32.xlu0 %v10, 120
    %v12 = vpop.permute.xlu0 %11
    %vm13 = vcmask 64512
    %s14 = scalar_lea.vmem [#allocation2], 1
    %15 = vst.msk [vmem:[%s14] sm:$0x1] %vm13, %v12
    %s17 = sshllo.u32 0, 2
    %v19 = vld [vmem:[#allocation2] sm:%s17]
    %s20 = sshllo.u32 0, 2
    %21 = vst [vmem:[#allocation0] sm:%s20] %v19
    %s23 = ssub.s32 32, 32
    %24 = vsyncadd [#allocation1], %s23
    %s26 = sshll.u32 [#allocation0], 4
    %s27 = int_to_ptr.vmem [resolvable:$true] %s26
    %29 = dma.vmem_to_hbm [thread:$0]  %s27, 32, %s1, [#allocation1]
    %30 = dma.done [#allocation1], 32
    %31 = vsyncpa [#allocation1], 1

// kernel: mlp_gen_policy_forward.1
$region0: #{mlp_gen_policy_forward.1}
  #allocation0 [shape = 'u32[]', space=smem, size = 0x4, offset = 0x4, fixed_abs, tag = 'smem constant byte address 0x4 - core index']
  #allocation1 [shape = 'u32[144,128]{1,0:T(1,128)}', space=vmem, size = 0x12000, scoped, tag = 'internal scratch']
  %s0 = inlined_call_operand.hbm [shape: f32[16,16], index: 0, kind: input, shape index: {}]
  %s1 = inlined_call_operand.hbm [shape: f32[16,8], index: 1, kind: input, shape index: {}]
  %s2 = inlined_call_operand.hbm [shape: bf16[16,32], index: 2, kind: input, shape index: {}]
  %s3 = inlined_call_operand.hbm [shape: f32[1,32], index: 3, kind: input, shape index: {}]
  %s4 = inlined_call_operand.hbm [shape: bf16[32,32], index: 4, kind: input, shape index: {}]
  %s5 = inlined_call_operand.hbm [shape: f32[1,32], index: 5, kind: input, shape index: {}]
  %s6 = inlined_call_operand.hbm [shape: bf16[32,8], index: 6, kind: input, shape index: {}]
  %s7 = inlined_call_operand.hbm [shape: f32[1,8], index: 7, kind: input, shape index: {}]
  %s8 = inlined_call_operand.hbm [shape: s32[16,1], index: 8, kind: output, shape index: {0}]
  %s9 = inlined_call_operand.hbm [shape: f32[16,8], index: 9, kind: output, shape index: {1}]
  %s10 = inlined_call_operand.hbm [shape: f32[16,1], index: 10, kind: output, shape index: {2}]
  %11 = xla_tuple %s8, %s9, %s10
  %s12 = sld [smem:[#allocation0]]
  $region113: #{mlp_gen_policy_forward.1} parent=0
    _
  %s14 = ssub.s32 1, %s12
  %s15 = scalar_select 0, %s14, %s12
  $region1: #{mlp_gen_policy_forward.1} parent=0
    #allocation2 [shape = 'u8[8192]{0}', space=vmem, size = 0x2000, scoped, tag = 'input window, operand 0']
    #allocation3 [shape = 's32[2]{0}', space=sflag, size = 0x8, scoped, tag = 'scoped memory for mlp_gen_policy_forward.1']
    #allocation4 [shape = 's32[2]{0}', space=sflag, size = 0x8, scoped, tag = 'scoped memory for mlp_gen_policy_forward.1']
    #allocation5 [shape = 'u8[8192]{0}', space=vmem, size = 0x2000, scoped, tag = 'input window, operand 1']
    #allocation6 [shape = 's32[2]{0}', space=sflag, size = 0x8, scoped, tag = 'scoped memory for mlp_gen_policy_forward.1']
    #allocation7 [shape = 'u8[4096]{0}', space=vmem, size = 0x1000, scoped, tag = 'input window, operand 2, single buffered']
    #allocation8 [shape = 'u8[512]{0}', space=vmem, size = 0x400, scoped, tag = 'input window, operand 3, single buffered']
    #allocation9 [shape = 's32[1]{0}', space=sflag, size = 0x4, scoped, tag = 'scoped memory for mlp_gen_policy_forward.1']
    #allocation10 [shape = 'u8[8192]{0}', space=vmem, size = 0x2000, scoped, tag = 'input window, operand 4, single buffered']
    #allocation11 [shape = 'u8[512]{0}', space=vmem, size = 0x400, scoped, tag = 'input window, operand 5, single buffered']
    #allocation12 [shape = 's32[1]{0}', space=sflag, size = 0x4, scoped, tag = 'scoped memory for mlp_gen_policy_forward.1']
    #allocation13 [shape = 'u8[8192]{0}', space=vmem, size = 0x2000, scoped, tag = 'input window, operand 6, single buffered']
    #allocation14 [shape = 'u8[512]{0}', space=vmem, size = 0x400, scoped, tag = 'input window, operand 7, single buffered']
    #allocation15 [shape = 's32[1]{0}', space=sflag, size = 0x4, scoped, tag = 'scoped memory for mlp_gen_policy_forward.1']
    #allocation16 [shape = 'u8[8192]{0}', space=vmem, size = 0x2000, scoped, tag = 'output window, operand 0']
    #allocation17 [shape = 'u8[8192]{0}', space=vmem, size = 0x2000, scoped, tag = 'output window, operand 1']
    #allocation18 [shape = 's32[2]{0}', space=sflag, size = 0x8, scoped, tag = 'scoped memory for mlp_gen_policy_forward.1']
    #allocation19 [shape = 'u8[8192]{0}', space=vmem, size = 0x2000, scoped, tag = 'output window, operand 2']
    %16 = vsyncpa [#allocation3], 0
    %s17 = scalar_lea.sflag [#allocation3], 1
    %18 = vsyncpa %s17, 0
    %19 = vsyncpa [#allocation6], 0
    %s20 = scalar_lea.sflag [#allocation6], 1
    %21 = vsyncpa %s20, 0
    %22 = vsyncpa [#allocation9], 0
    %23 = vsyncpa [#allocation12], 0
    %24 = vsyncpa [#allocation15], 0
    %25 = vsyncpa [#allocation4], 0
    %s26 = scalar_lea.sflag [#allocation4], 1
    %27 = vsyncpa %s26, 0
    %28 = vsyncpa [#allocation18], 0
    %s29 = scalar_lea.sflag [#allocation18], 1
    %30 = vsyncpa %s29, 0
    loop: start=0, step=1, limit=4
    $region2: #{mlp_gen_policy_forward.1} parent=1 // loop_pre_header
      _
    $region3: #{mlp_gen_policy_forward.1} parent=1 // loop_header
      %s32 = sphi 0, %s36
      %p33 = scmp.ge.s32.totalorder %s32, 4
      %s42 = sphi 0, %s44
      %s45 = sphi 0, %s42
      %s46 = sphi 0, %s45
      %s62 = sphi 0, %s46
      %s68 = sphi 0, %s70
      %s71 = sphi 0, %s68
      %s72 = sphi 0, %s71
      %s88 = sphi 0, %s72
      %s92 = sphi 0, %s92
      %s94 = sphi 0, %s92
      %s95 = sphi 0, %s94
      %s109 = sphi 0, %s95
      %s113 = sphi 0, %s113
      %s115 = sphi 0, %s113
      %s116 = sphi 0, %s115
      %s130 = sphi 0, %s116
      %s134 = sphi 0, %s134
      %s136 = sphi 0, %s134
      %s137 = sphi 0, %s136
      %s151 = sphi 0, %s137
      %s155 = sphi 0, %s155
      %s157 = sphi 0, %s155
      %s158 = sphi 0, %s157
      %s172 = sphi 0, %s158
      %s176 = sphi 0, %s176
      %s178 = sphi 0, %s176
      %s179 = sphi 0, %s178
      %s193 = sphi 0, %s179
      %s197 = sphi 0, %s197
      %s199 = sphi 0, %s197
      %s200 = sphi 0, %s199
      %s214 = sphi 0, %s200
      %s220 = sphi 0, %s222
      %s223 = sphi 0, %s220
      %s224 = sphi 0, %s223
      %s240 = sphi 0, %s224
      %s246 = sphi 0, %s248
      %s249 = sphi 0, %s246
      %s250 = sphi 0, %s249
      %s266 = sphi 0, %s250
      %s272 = sphi 0, %s274
      %s275 = sphi 0, %s272
      %s276 = sphi 0, %s275
      %s292 = sphi 0, %s276
    $region4: #{mlp_gen_policy_forward.1} parent=1 // loop_header_branch
      %35 = sbr.rel (%p33) target = $region8
    $region5: #{mlp_gen_policy_forward.1} parent=1 // loop_body
      %s37 = ssub.s32 %s32, 1
      %s38 = ssub.s32 %s32, 2
      %s39 = sadd.s32 %s32, 1
      %s40 = ssub.s32 %s32, %s39
      %p41 = scmp.eq.s32.totalorder %s40, 0
      %s43 = sadd.s32 %s42, 1
      %s44 = scalar_select %p41, %s42, %s43
      %p47 = pneg %p41
      %p48 = scmp.eq.s32.totalorder %s32, 1
      %p49 = por %p47, %p48
      %p50 = scmp.ne.s32.totalorder %s42, %s45
      %p51 = scmp.eq.s32.totalorder %s32, 0
      %p52 = por %p50, %p51
      %p53 = scmp.ne.s32.totalorder %s42, %s45
      %p54 = scmp.eq.s32.totalorder %s37, 1
      %p55 = por %p53, %p54
      %p56 = scmp.ne.s32.totalorder %s45, %s46
      %p57 = scmp.eq.s32.totalorder %s37, 0
      %p58 = por %p56, %p57
      %p59 = scmp.ne.s32.totalorder %s45, %s46
      %p60 = scmp.eq.s32.totalorder %s38, 1
      %p61 = por %p59, %p60
      %p63 = scmp.ne.s32.totalorder %s46, %s62
      %p64 = scmp.eq.s32.totalorder %s38, 0
      %p65 = por %p63, %p64
      %s66 = ssub.s32 %s32, %s39
      %p67 = scmp.eq.s32.totalorder %s66, 0
      %s69 = sadd.s32 %s68, 1
      %s70 = scalar_select %p67, %s68, %s69
      %p73 = pneg %p67
      %p74 = scmp.eq.s32.totalorder %s32, 1
      %p75 = por %p73, %p74
      %p76 = scmp.ne.s32.totalorder %s68, %s71
      %p77 = scmp.eq.s32.totalorder %s32, 0
      %p78 = por %p76, %p77
      %p79 = scmp.ne.s32.totalorder %s68, %s71
      %p80 = scmp.eq.s32.totalorder %s37, 1
      %p81 = por %p79, %p80
      %p82 = scmp.ne.s32.totalorder %s71, %s72
      %p83 = scmp.eq.s32.totalorder %s37, 0
      %p84 = por %p82, %p83
      %p85 = scmp.ne.s32.totalorder %s71, %s72
      %p86 = scmp.eq.s32.totalorder %s38, 1
      %p87 = por %p85, %p86
      %p89 = scmp.ne.s32.totalorder %s72, %s88
      %p90 = scmp.eq.s32.totalorder %s38, 0
      %p91 = por %p89, %p90
      %s93 = sadd.s32 %s92, 1
      %p96 = scmp.eq.s32.totalorder %s32, 1
      %p97 = scmp.ne.s32.totalorder %s92, %s94
      %p98 = scmp.eq.s32.totalorder %s32, 0
      %p99 = por %p97, %p98
      %p100 = scmp.ne.s32.totalorder %s92, %s94
      %p101 = scmp.eq.s32.totalorder %s37, 1
      %p102 = por %p100, %p101
      %p103 = scmp.ne.s32.totalorder %s94, %s95
      %p104 = scmp.eq.s32.totalorder %s37, 0
      %p105 = por %p103, %p104
      %p106 = scmp.ne.s32.totalorder %s94, %s95
      %p107 = scmp.eq.s32.totalorder %s38, 1
      %p108 = por %p106, %p107
      %p110 = scmp.ne.s32.totalorder %s95, %s109
      %p111 = scmp.eq.s32.totalorder %s38, 0
      %p112 = por %p110, %p111
      %s114 = sadd.s32 %s113, 1
      %p117 = scmp.eq.s32.totalorder %s32, 1
      %p118 = scmp.ne.s32.totalorder %s113, %s115
      %p119 = scmp.eq.s32.totalorder %s32, 0
      %p120 = por %p118, %p119
      %p121 = scmp.ne.s32.totalorder %s113, %s115
      %p122 = scmp.eq.s32.totalorder %s37, 1
      %p123 = por %p121, %p122
      %p124 = scmp.ne.s32.totalorder %s115, %s116
      %p125 = scmp.eq.s32.totalorder %s37, 0
      %p126 = por %p124, %p125
      %p127 = scmp.ne.s32.totalorder %s115, %s116
      %p128 = scmp.eq.s32.totalorder %s38, 1
      %p129 = por %p127, %p128
      %p131 = scmp.ne.s32.totalorder %s116, %s130
      %p132 = scmp.eq.s32.totalorder %s38, 0
      %p133 = por %p131, %p132
      %s135 = sadd.s32 %s134, 1
      %p138 = scmp.eq.s32.totalorder %s32, 1
      %p139 = scmp.ne.s32.totalorder %s134, %s136
      %p140 = scmp.eq.s32.totalorder %s32, 0
      %p141 = por %p139, %p140
      %p142 = scmp.ne.s32.totalorder %s134, %s136
      %p143 = scmp.eq.s32.totalorder %s37, 1
      %p144 = por %p142, %p143
      %p145 = scmp.ne.s32.totalorder %s136, %s137
      %p146 = scmp.eq.s32.totalorder %s37, 0
      %p147 = por %p145, %p146
      %p148 = scmp.ne.s32.totalorder %s136, %s137
      %p149 = scmp.eq.s32.totalorder %s38, 1
      %p150 = por %p148, %p149
      %p152 = scmp.ne.s32.totalorder %s137, %s151
      %p153 = scmp.eq.s32.totalorder %s38, 0
      %p154 = por %p152, %p153
      %s156 = sadd.s32 %s155, 1
      %p159 = scmp.eq.s32.totalorder %s32, 1
      %p160 = scmp.ne.s32.totalorder %s155, %s157
      %p161 = scmp.eq.s32.totalorder %s32, 0
      %p162 = por %p160, %p161
      %p163 = scmp.ne.s32.totalorder %s155, %s157
      %p164 = scmp.eq.s32.totalorder %s37, 1
      %p165 = por %p163, %p164
      %p166 = scmp.ne.s32.totalorder %s157, %s158
      %p167 = scmp.eq.s32.totalorder %s37, 0
      %p168 = por %p166, %p167
      %p169 = scmp.ne.s32.totalorder %s157, %s158
      %p170 = scmp.eq.s32.totalorder %s38, 1
      %p171 = por %p169, %p170
      %p173 = scmp.ne.s32.totalorder %s158, %s172
      %p174 = scmp.eq.s32.totalorder %s38, 0
      %p175 = por %p173, %p174
      %s177 = sadd.s32 %s176, 1
      %p180 = scmp.eq.s32.totalorder %s32, 1
      %p181 = scmp.ne.s32.totalorder %s176, %s178
      %p182 = scmp.eq.s32.totalorder %s32, 0
      %p183 = por %p181, %p182
      %p184 = scmp.ne.s32.totalorder %s176, %s178
      %p185 = scmp.eq.s32.totalorder %s37, 1
      %p186 = por %p184, %p185
      %p187 = scmp.ne.s32.totalorder %s178, %s179
      %p188 = scmp.eq.s32.totalorder %s37, 0
      %p189 = por %p187, %p188
      %p190 = scmp.ne.s32.totalorder %s178, %s179
      %p191 = scmp.eq.s32.totalorder %s38, 1
      %p192 = por %p190, %p191
      %p194 = scmp.ne.s32.totalorder %s179, %s193
      %p195 = scmp.eq.s32.totalorder %s38, 0
      %p196 = por %p194, %p195
      %s198 = sadd.s32 %s197, 1
      %p201 = scmp.eq.s32.totalorder %s32, 1
      %p202 = scmp.ne.s32.totalorder %s197, %s199
      %p203 = scmp.eq.s32.totalorder %s32, 0
      %p204 = por %p202, %p203
      %p205 = scmp.ne.s32.totalorder %s197, %s199
      %p206 = scmp.eq.s32.totalorder %s37, 1
      %p207 = por %p205, %p206
      %p208 = scmp.ne.s32.totalorder %s199, %s200
      %p209 = scmp.eq.s32.totalorder %s37, 0
      %p210 = por %p208, %p209
      %p211 = scmp.ne.s32.totalorder %s199, %s200
      %p212 = scmp.eq.s32.totalorder %s38, 1
      %p213 = por %p211, %p212
      %p215 = scmp.ne.s32.totalorder %s200, %s214
      %p216 = scmp.eq.s32.totalorder %s38, 0
      %p217 = por %p215, %p216
      %s218 = ssub.s32 %s32, %s39
      %p219 = scmp.eq.s32.totalorder %s218, 0
      %s221 = sadd.s32 %s220, 1
      %s222 = scalar_select %p219, %s220, %s221
      %p225 = pneg %p219
      %p226 = scmp.eq.s32.totalorder %s32, 1
      %p227 = por %p225, %p226
      %p228 = scmp.ne.s32.totalorder %s220, %s223
      %p229 = scmp.eq.s32.totalorder %s32, 0
      %p230 = por %p228, %p229
      %p231 = scmp.ne.s32.totalorder %s220, %s223
      %p232 = scmp.eq.s32.totalorder %s37, 1
      %p233 = por %p231, %p232
      %p234 = scmp.ne.s32.totalorder %s223, %s224
      %p235 = scmp.eq.s32.totalorder %s37, 0
      %p236 = por %p234, %p235
      %p237 = scmp.ne.s32.totalorder %s223, %s224
      %p238 = scmp.eq.s32.totalorder %s38, 1
      %p239 = por %p237, %p238
      %p241 = scmp.ne.s32.totalorder %s224, %s240
      %p242 = scmp.eq.s32.totalorder %s38, 0
      %p243 = por %p241, %p242
      %s244 = ssub.s32 %s32, %s39
      %p245 = scmp.eq.s32.totalorder %s244, 0
      %s247 = sadd.s32 %s246, 1
      %s248 = scalar_select %p245, %s246, %s247
      %p251 = pneg %p245
      %p252 = scmp.eq.s32.totalorder %s32, 1
      %p253 = por %p251, %p252
      %p254 = scmp.ne.s32.totalorder %s246, %s249
      %p255 = scmp.eq.s32.totalorder %s32, 0
      %p256 = por %p254, %p255
      %p257 = scmp.ne.s32.totalorder %s246, %s249
      %p258 = scmp.eq.s32.totalorder %s37, 1
      %p259 = por %p257, %p258
      %p260 = scmp.ne.s32.totalorder %s249, %s250
      %p261 = scmp.eq.s32.totalorder %s37, 0
      %p262 = por %p260, %p261
      %p263 = scmp.ne.s32.totalorder %s249, %s250
      %p264 = scmp.eq.s32.totalorder %s38, 1
      %p265 = por %p263, %p264
      %p267 = scmp.ne.s32.totalorder %s250, %s266
      %p268 = scmp.eq.s32.totalorder %s38, 0
      %p269 = por %p267, %p268
      %s270 = ssub.s32 %s32, %s39
      %p271 = scmp.eq.s32.totalorder %s270, 0
      %s273 = sadd.s32 %s272, 1
      %s274 = scalar_select %p271, %s272, %s273
      %p277 = pneg %p271
      %p278 = scmp.eq.s32.totalorder %s32, 1
      %p279 = por %p277, %p278
      %p280 = scmp.ne.s32.totalorder %s272, %s275
      %p281 = scmp.eq.s32.totalorder %s32, 0
      %p282 = por %p280, %p281
      %p283 = scmp.ne.s32.totalorder %s272, %s275
      %p284 = scmp.eq.s32.totalorder %s37, 1
      %p285 = por %p283, %p284
      %p286 = scmp.ne.s32.totalorder %s275, %s276
      %p287 = scmp.eq.s32.totalorder %s37, 0
      %p288 = por %p286, %p287
      %p289 = scmp.ne.s32.totalorder %s275, %s276
      %p290 = scmp.eq.s32.totalorder %s38, 1
      %p291 = por %p289, %p290
      %p293 = scmp.ne.s32.totalorder %s276, %s292
      %p294 = scmp.eq.s32.totalorder %s38, 0
      %p295 = por %p293, %p294
      %p296 = scmp.le.s32.totalorder 1, %s32
      %p297 = scmp.lt.s32.totalorder %s32, 3
      %p298 = pnand %p296, %p297
      %p299 = pneg %p298
      // Predicated region
      $region9: #{mlp_gen_policy_forward.1} parent=5 // pred_check
        _
      $region10: #{mlp_gen_policy_forward.1} parent=5 // pred_check_branch
        %301 = sbr.rel (%p298) target = $region12
      $region11: #{mlp_gen_policy_forward.1} parent=5 // pred_region
        %s302 = ssub.s32 %s32, 1
        // Predicated region
        $region13: #{mlp_gen_policy_forward.1} parent=11 // pred_check
          %p303 = pneg %p105
        $region14: #{mlp_gen_policy_forward.1} parent=11 // pred_check_branch
          %305 = sbr.rel (%p303) target = $region16
        $region15: #{mlp_gen_policy_forward.1} parent=11 // pred_region
          %s307 = ssub.s32 128, 128
          %308 = vsyncadd [#allocation6], %s307
          %s309 = sshll.u32 [#allocation7], 4
          %s310 = int_to_ptr.vmem [resolvable:$true] %s309
          %315 = dma.hbm_to_vmem [thread:$0]  %s2, 128, %s310, [#allocation6], 64, 64, 4
        $region16: #{mlp_gen_policy_forward.1} parent=11 // pred_fallthru
          _
        // Predicated region
        $region17: #{mlp_gen_policy_forward.1} parent=11 // pred_check
          %p316 = pneg %p126
        $region18: #{mlp_gen_policy_forward.1} parent=11 // pred_check_branch
          %318 = sbr.rel (%p316) target = $region20
        $region19: #{mlp_gen_policy_forward.1} parent=11 // pred_region
          %s320 = ssub.s32 16, 16
          %321 = vsyncadd [#allocation9], %s320
          %s323 = sshll.u32 [#allocation8], 4
          %s324 = int_to_ptr.vmem [resolvable:$true] %s323
          %326 = dma.hbm_to_vmem [thread:$0]  %s3, 16, %s324, [#allocation9]
        $region20: #{mlp_gen_policy_forward.1} parent=11 // pred_fallthru
          _
        // Predicated region
        $region21: #{mlp_gen_policy_forward.1} parent=11 // pred_check
          %p327 = pneg %p147
        $region22: #{mlp_gen_policy_forward.1} parent=11 // pred_check_branch
          %329 = sbr.rel (%p327) target = $region24
        $region23: #{mlp_gen_policy_forward.1} parent=11 // pred_region
          %s331 = ssub.s32 256, 256
          %332 = vsyncadd [#allocation9], %s331
          %s333 = sshll.u32 [#allocation10], 4
          %s334 = int_to_ptr.vmem [resolvable:$true] %s333
          %339 = dma.hbm_to_vmem [thread:$0]  %s4, 256, %s334, [#allocation9], 64, 64, 4
        $region24: #{mlp_gen_policy_forward.1} parent=11 // pred_fallthru
          _
        // Predicated region
        $region25: #{mlp_gen_policy_forward.1} parent=11 // pred_check
          %p340 = pneg %p168
        $region26: #{mlp_gen_policy_forward.1} parent=11 // pred_check_branch
          %342 = sbr.rel (%p340) target = $region28
        $region27: #{mlp_gen_policy_forward.1} parent=11 // pred_region
          %s344 = ssub.s32 16, 16
          %345 = vsyncadd [#allocation12], %s344
          %s347 = sshll.u32 [#allocation11], 4
          %s348 = int_to_ptr.vmem [resolvable:$true] %s347
          %350 = dma.hbm_to_vmem [thread:$0]  %s5, 16, %s348, [#allocation12]
        $region28: #{mlp_gen_policy_forward.1} parent=11 // pred_fallthru
          _
        // Predicated region
        $region29: #{mlp_gen_policy_forward.1} parent=11 // pred_check
          %p351 = pneg %p189
        $region30: #{mlp_gen_policy_forward.1} parent=11 // pred_check_branch
          %353 = sbr.rel (%p351) target = $region32
        $region31: #{mlp_gen_policy_forward.1} parent=11 // pred_region
          %s355 = ssub.s32 256, 256
          %356 = vsyncadd [#allocation12], %s355
          %s357 = sshll.u32 [#allocation13], 4
          %s358 = int_to_ptr.vmem [resolvable:$true] %s357
          %363 = dma.hbm_to_vmem [thread:$0]  %s6, 256, %s358, [#allocation12], 64, 64, 4
        $region32: #{mlp_gen_policy_forward.1} parent=11 // pred_fallthru
          _
        // Predicated region
        $region33: #{mlp_gen_policy_forward.1} parent=11 // pred_check
          %p364 = pneg %p210
        $region34: #{mlp_gen_policy_forward.1} parent=11 // pred_check_branch
          %366 = sbr.rel (%p364) target = $region36
        $region35: #{mlp_gen_policy_forward.1} parent=11 // pred_region
          %s368 = ssub.s32 16, 16
          %369 = vsyncadd [#allocation15], %s368
          %s371 = sshll.u32 [#allocation14], 4
          %s372 = int_to_ptr.vmem [resolvable:$true] %s371
          %374 = dma.hbm_to_vmem [thread:$0]  %s7, 16, %s372, [#allocation15]
        $region36: #{mlp_gen_policy_forward.1} parent=11 // pred_fallthru
          _
      $region12: #{mlp_gen_policy_forward.1} parent=5 // pred_fallthru
        _
      %p375 = scmp.lt.s32.totalorder %s32, 2
      // Predicated region
      $region37: #{mlp_gen_policy_forward.1} parent=5 // pred_check
        %p376 = pneg %p375
      $region38: #{mlp_gen_policy_forward.1} parent=5 // pred_check_branch
        %378 = sbr.rel (%p376) target = $region40
      $region39: #{mlp_gen_policy_forward.1} parent=5 // pred_region
        // Predicated region
        $region41: #{mlp_gen_policy_forward.1} parent=39 // pred_check
          %p379 = pneg %p52
        $region42: #{mlp_gen_policy_forward.1} parent=39 // pred_check_branch
          %381 = sbr.rel (%p379) target = $region44
        $region43: #{mlp_gen_policy_forward.1} parent=39 // pred_region
          %s382 = sand.u32 %s42, 1
          %s383 = scalar_lea.sflag [#allocation3], %s382
          %s384 = sand.u32 %s42, 1
          %s385 = smul.addr %s384, 8
          %s386 = scalar_lea.vmem [#allocation2], %s385
          %s388 = ssub.s32 128, 128
          %389 = vsyncadd %s383, %s388
          %s390 = smul.addr %s32, 128
          %s391 = scalar_lea.hbm %s0, %s390
          %s393 = sshll.u32 %s386, 4
          %s394 = int_to_ptr.vmem [resolvable:$true] %s393
          %396 = dma.hbm_to_vmem [thread:$0]  %s391, 128, %s394, %s383
        $region44: #{mlp_gen_policy_forward.1} parent=39 // pred_fallthru
          _
        // Predicated region
        $region45: #{mlp_gen_policy_forward.1} parent=39 // pred_check
          %p397 = pneg %p78
        $region46: #{mlp_gen_policy_forward.1} parent=39 // pred_check_branch
          %399 = sbr.rel (%p397) target = $region48
        $region47: #{mlp_gen_policy_forward.1} parent=39 // pred_region
          %s400 = sand.u32 %s32, 1
          %s401 = scalar_lea.sflag [#allocation6], %s400
          %s402 = sand.u32 %s68, 1
          %s403 = smul.addr %s402, 8
          %s404 = scalar_lea.vmem [#allocation5], %s403
          %s406 = ssub.s32 128, 128
          %407 = vsyncadd %s401, %s406
          %s408 = smul.addr %s32, 128
          %s409 = scalar_lea.hbm %s1, %s408
          %s411 = sshll.u32 %s404, 4
          %s412 = int_to_ptr.vmem [resolvable:$true] %s411
          %414 = dma.hbm_to_vmem [thread:$0]  %s409, 128, %s412, %s401
        $region48: #{mlp_gen_policy_forward.1} parent=39 // pred_fallthru
          _
      $region40: #{mlp_gen_policy_forward.1} parent=5 // pred_fallthru
        _
      %p415 = scmp.le.s32.totalorder 1, %s32
      %p416 = scmp.lt.s32.totalorder %s32, 3
      %p417 = pnand %p415, %p416
      %p418 = pneg %p417
      // Predicated region
      $region49: #{mlp_gen_policy_forward.1} parent=5 // pred_check
        _
      $region50: #{mlp_gen_policy_forward.1} parent=5 // pred_check_branch
        %420 = sbr.rel (%p417) target = $region52
      $region51: #{mlp_gen_policy_forward.1} parent=5 // pred_region
        %s421 = ssub.s32 %s32, 1
        %s422 = sand.u32 %s45, 1
        %s423 = scalar_lea.sflag [#allocation3], %s422
        %s424 = sand.u32 %s45, 1
        %s425 = smul.addr %s424, 8
        %s426 = scalar_lea.vmem [#allocation2], %s425
        // Predicated region
        $region53: #{mlp_gen_policy_forward.1} parent=51 // pred_check
          %p427 = pneg %p58
        $region54: #{mlp_gen_policy_forward.1} parent=51 // pred_check_branch
          %429 = sbr.rel (%p427) target = $region56
        $region55: #{mlp_gen_policy_forward.1} parent=51 // pred_region
          %430 = dma.done %s423, 128
        $region56: #{mlp_gen_policy_forward.1} parent=51 // pred_fallthru
          _
        %s431 = sand.u32 %s37, 1
        %s432 = scalar_lea.sflag [#allocation6], %s431
        %s433 = sand.u32 %s71, 1
        %s434 = smul.addr %s433, 8
        %s435 = scalar_lea.vmem [#allocation5], %s434
        // Predicated region
        $region57: #{mlp_gen_policy_forward.1} parent=51 // pred_check
          %p436 = pneg %p84
        $region58: #{mlp_gen_policy_forward.1} parent=51 // pred_check_branch
          %438 = sbr.rel (%p436) target = $region60
        $region59: #{mlp_gen_policy_forward.1} parent=51 // pred_region
          %439 = dma.done %s432, 128
        $region60: #{mlp_gen_policy_forward.1} parent=51 // pred_fallthru
          _
        // Predicated region
        $region61: #{mlp_gen_policy_forward.1} parent=51 // pred_check
          %p440 = pneg %p105
        $region62: #{mlp_gen_policy_forward.1} parent=51 // pred_check_branch
          %442 = sbr.rel (%p440) target = $region64
        $region63: #{mlp_gen_policy_forward.1} parent=51 // pred_region
          %443 = dma.done [#allocation6], 128
        $region64: #{mlp_gen_policy_forward.1} parent=51 // pred_fallthru
          _
        // Predicated region
        $region65: #{mlp_gen_policy_forward.1} parent=51 // pred_check
          %p444 = pneg %p126
        $region66: #{mlp_gen_policy_forward.1} parent=51 // pred_check_branch
          %446 = sbr.rel (%p444) target = $region68
        $region67: #{mlp_gen_policy_forward.1} parent=51 // pred_region
          %447 = dma.done [#allocation9], 16
        $region68: #{mlp_gen_policy_forward.1} parent=51 // pred_fallthru
          _
        // Predicated region
        $region69: #{mlp_gen_policy_forward.1} parent=51 // pred_check
          %p448 = pneg %p147
        $region70: #{mlp_gen_policy_forward.1} parent=51 // pred_check_branch
          %450 = sbr.rel (%p448) target = $region72
        $region71: #{mlp_gen_policy_forward.1} parent=51 // pred_region
          %451 = dma.done [#allocation9], 256
        $region72: #{mlp_gen_policy_forward.1} parent=51 // pred_fallthru
          _
        // Predicated region
        $region73: #{mlp_gen_policy_forward.1} parent=51 // pred_check
          %p452 = pneg %p168
        $region74: #{mlp_gen_policy_forward.1} parent=51 // pred_check_branch
          %454 = sbr.rel (%p452) target = $region76
        $region75: #{mlp_gen_policy_forward.1} parent=51 // pred_region
          %455 = dma.done [#allocation12], 16
        $region76: #{mlp_gen_policy_forward.1} parent=51 // pred_fallthru
          _
        // Predicated region
        $region77: #{mlp_gen_policy_forward.1} parent=51 // pred_check
          %p456 = pneg %p189
        $region78: #{mlp_gen_policy_forward.1} parent=51 // pred_check_branch
          %458 = sbr.rel (%p456) target = $region80
        $region79: #{mlp_gen_policy_forward.1} parent=51 // pred_region
          %459 = dma.done [#allocation12], 256
        $region80: #{mlp_gen_policy_forward.1} parent=51 // pred_fallthru
          _
        // Predicated region
        $region81: #{mlp_gen_policy_forward.1} parent=51 // pred_check
          %p460 = pneg %p210
        $region82: #{mlp_gen_policy_forward.1} parent=51 // pred_check_branch
          %462 = sbr.rel (%p460) target = $region84
        $region83: #{mlp_gen_policy_forward.1} parent=51 // pred_region
          %463 = dma.done [#allocation15], 16
        $region84: #{mlp_gen_policy_forward.1} parent=51 // pred_fallthru
          _
        %s464 = sand.u32 %s45, 1
        %s465 = scalar_lea.sflag [#allocation3], %s464
        %s466 = sand.u32 %s45, 1
        %s467 = smul.addr %s466, 8
        %s468 = scalar_lea.vmem [#allocation2], %s467
        %p469 = pneg %p58
        %p470 = pneg %p55
        %s471 = sand.u32 %s37, 1
        %s472 = scalar_lea.sflag [#allocation6], %s471
        %s473 = sand.u32 %s71, 1
        %s474 = smul.addr %s473, 8
        %s475 = scalar_lea.vmem [#allocation5], %s474
        %p476 = pneg %p84
        %p477 = pneg %p81
        %p478 = pneg %p105
        %p479 = pneg %p102
        %p480 = pneg %p126
        %p481 = pneg %p123
        %p482 = pneg %p147
        %p483 = pneg %p144
        %p484 = pneg %p168
        %p485 = pneg %p165
        %p486 = pneg %p189
        %p487 = pneg %p186
        %p488 = pneg %p210
        %p489 = pneg %p207
        %p490 = pneg %p236
        %p491 = pneg %p233
        %s492 = sand.u32 %s223, 1
        %s493 = scalar_lea.sflag [#allocation4], %s492
        %s494 = sand.u32 %s223, 1
        %s495 = smul.addr %s494, 8
        %s496 = scalar_lea.vmem [#allocation16], %s495
        %p497 = pneg %p262
        %p498 = pneg %p259
        %s499 = sand.u32 %s37, 1
        %s500 = scalar_lea.sflag [#allocation18], %s499
        %s501 = sand.u32 %s249, 1
        %s502 = smul.addr %s501, 8
        %s503 = scalar_lea.vmem [#allocation17], %s502
        %p504 = pneg %p288
        %p505 = pneg %p285
        %s506 = sand.u32 %s37, 1
        %s507 = scalar_lea.sflag [#allocation18], %s506
        %s508 = sand.u32 %s275, 1
        %s509 = smul.addr %s508, 8
        %s510 = scalar_lea.vmem [#allocation19], %s509
        %v512 = vld [vmem:[%s426] sm:$0xff]
        %v513 = vpack.c.bf16 %v512, %v512
        %v514 = vld [vmem:[#allocation7] sm:$0xf]
        %v515 = vld [vmem:[#allocation7 + $0x4] sm:$0xf]
        %v516 = vld [vmem:[#allocation8] sm:$0x1]
        %v518 = vlaneseq
        %v519 = vshrl.u32 %v518, 7
        %v520 = vsub.s32 0, %v519
        %v521 = vrot.slane %v516, %v520
        %v525 = vunpack.c.l.b16 %v514
        %v526 = vunpack.c.l.b16 %v515
        %v527 = vpack.c.b16 %v526, %v525
        %vm529 = vcmask 130048
        %v531 = vsel %vm529, %v513, 0
        %533 = vmatprep.subr.bf16.mxu0 0
        %534 = vmatpush1.bf16.msra.mxu0 %v527
        %535 = vmatprep.subr.bf16.mxu0 0
        %536 = vmatpush1.bf16.msra.mxu0 0
        %537 = vmatprep.subr.bf16.mxu0 0
        %538 = vmatpush1.bf16.msra.mxu0 0
        %539 = vmatprep.subr.bf16.mxu0 0
        %540 = vmatpush1.bf16.msra.mxu0 0
        %541 = vmatprep.subr.bf16.mxu0 0
        %542 = vmatpush1.bf16.msra.mxu0 0
        %543 = vmatprep.subr.bf16.mxu0 0
        %544 = vmatpush1.bf16.msra.mxu0 0
        %545 = vmatprep.subr.bf16.mxu0 0
        %546 = vmatpush1.bf16.msra.mxu0 0
        %547 = vmatprep.subr.bf16.mxu0 0
        %548 = vmatpush1.bf16.msra.mxu0 0
        %549 = vmatprep.subr.bf16.mxu0 0
        %550 = vmatpush1.bf16.msra.mxu0 0
        %551 = vmatprep.subr.bf16.mxu0 0
        %552 = vmatpush1.bf16.msra.mxu0 0
        %553 = vmatprep.subr.bf16.mxu0 0
        %554 = vmatpush1.bf16.msra.mxu0 0
        %555 = vmatprep.subr.bf16.mxu0 0
        %556 = vmatpush1.bf16.msra.mxu0 0
        %557 = vmatprep.subr.bf16.mxu0 0
        %558 = vmatpush1.bf16.msra.mxu0 0
        %559 = vmatprep.subr.bf16.mxu0 0
        %560 = vmatpush1.bf16.msra.mxu0 0
        %561 = vmatprep.subr.bf16.mxu0 0
        %562 = vmatpush1.bf16.msra.mxu0 0
        %563 = vmatprep.subr.bf16.mxu0 0
        %564 = vmatpush1.bf16.msra.mxu0 0
        %565 = vmatprep.mubr.bf16.mxu0 0
        %566 = vmatmul.mubr.bf16.gmra.mrb[0].mxu0 %v531
        %v567 = vpop.f32.mrb[0].mxu0
        %v568 = vadd.f32 %v521, %v567
        %v569 = vpop.f32.mrb[0].mxu0
        %v570 = vpop.f32.mrb[0].mxu0
        %v571 = vpop.f32.mrb[0].mxu0
        %572 = vdwg.mxu0
        %v573 = vmax.f32 %v568, 0.0
        %v574 = vpack.c.bf16 %v573, %v573
        %v575 = vld [vmem:[#allocation10] sm:$0xf]
        %v576 = vld [vmem:[#allocation10 + $0x4] sm:$0xf]
        %v577 = vld [vmem:[#allocation10 + $0x8] sm:$0xf]
        %v578 = vld [vmem:[#allocation10 + $0xc] sm:$0xf]
        %v579 = vld [vmem:[#allocation11] sm:$0x1]
        %v581 = vlaneseq
        %v582 = vshrl.u32 %v581, 7
        %v583 = vsub.s32 0, %v582
        %v584 = vrot.slane %v579, %v583
        %v590 = vunpack.c.l.b16 %v575
        %v591 = vunpack.c.l.b16 %v576
        %v592 = vunpack.c.l.b16 %v577
        %v593 = vunpack.c.l.b16 %v578
        %v594 = vpack.c.b16 %v591, %v590
        %v595 = vpack.c.b16 %v593, %v592
        %vm598 = vcmask 261120
        %v600 = vsel %vm598, %v574, 0
        %602 = vmatprep.subr.bf16.mxu0 0
        %603 = vmatpush1.bf16.msra.mxu0 %v594
        %604 = vmatprep.subr.bf16.mxu0 0
        %605 = vmatpush1.bf16.msra.mxu0 %v595
        %606 = vmatprep.subr.bf16.mxu0 0
        %607 = vmatpush1.bf16.msra.mxu0 0
        %608 = vmatprep.subr.bf16.mxu0 0
        %609 = vmatpush1.bf16.msra.mxu0 0
        %610 = vmatprep.subr.bf16.mxu0 0
        %611 = vmatpush1.bf16.msra.mxu0 0
        %612 = vmatprep.subr.bf16.mxu0 0
        %613 = vmatpush1.bf16.msra.mxu0 0
        %614 = vmatprep.subr.bf16.mxu0 0
        %615 = vmatpush1.bf16.msra.mxu0 0
        %616 = vmatprep.subr.bf16.mxu0 0
        %617 = vmatpush1.bf16.msra.mxu0 0
        %618 = vmatprep.subr.bf16.mxu0 0
        %619 = vmatpush1.bf16.msra.mxu0 0
        %620 = vmatprep.subr.bf16.mxu0 0
        %621 = vmatpush1.bf16.msra.mxu0 0
        %622 = vmatprep.subr.bf16.mxu0 0
        %623 = vmatpush1.bf16.msra.mxu0 0
        %624 = vmatprep.subr.bf16.mxu0 0
        %625 = vmatpush1.bf16.msra.mxu0 0
        %626 = vmatprep.subr.bf16.mxu0 0
        %627 = vmatpush1.bf16.msra.mxu0 0
        %628 = vmatprep.subr.bf16.mxu0 0
        %629 = vmatpush1.bf16.msra.mxu0 0
        %630 = vmatprep.subr.bf16.mxu0 0
        %631 = vmatpush1.bf16.msra.mxu0 0
        %632 = vmatprep.subr.bf16.mxu0 0
        %633 = vmatpush1.bf16.msra.mxu0 0
        %634 = vmatprep.mubr.bf16.mxu0 0
        %635 = vmatmul.mubr.bf16.gmra.mrb[0].mxu0 %v600
        %v636 = vpop.f32.mrb[0].mxu0
        %v637 = vadd.f32 %v584, %v636
        %v638 = vpop.f32.mrb[0].mxu0
        %v639 = vpop.f32.mrb[0].mxu0
        %v640 = vpop.f32.mrb[0].mxu0
        %641 = vdwg.mxu0
        %v642 = vmax.f32 %v637, 0.0
        %v643 = vpack.c.bf16 %v642, %v642
        %v644 = vld [vmem:[#allocation13] sm:$0xf]
        %v645 = vld [vmem:[#allocation13 + $0x4] sm:$0xf]
        %v646 = vld [vmem:[#allocation13 + $0x8] sm:$0xf]
        %v647 = vld [vmem:[#allocation13 + $0xc] sm:$0xf]
        %v648 = vld [vmem:[#allocation14] sm:$0x1]
        %v650 = vlaneseq
        %v651 = vshrl.u32 %v650, 7
        %v652 = vsub.s32 0, %v651
        %v653 = vrot.slane %v648, %v652
        %v659 = vunpack.c.l.b16 %v644
        %v660 = vunpack.c.l.b16 %v645
        %v661 = vunpack.c.l.b16 %v646
        %v662 = vunpack.c.l.b16 %v647
        %v663 = vpack.c.b16 %v660, %v659
        %v664 = vpack.c.b16 %v662, %v661
        %v668 = vsel %vm598, %v643, 0
        %670 = vmatprep.subr.bf16.mxu0 0
        %671 = vmatpush1.bf16.msra.mxu0 %v663
        %672 = vmatprep.subr.bf16.mxu0 0
        %673 = vmatpush1.bf16.msra.mxu0 %v664
        %674 = vmatprep.subr.bf16.mxu0 0
        %675 = vmatpush1.bf16.msra.mxu0 0
        %676 = vmatprep.subr.bf16.mxu0 0
        %677 = vmatpush1.bf16.msra.mxu0 0
        %678 = vmatprep.subr.bf16.mxu0 0
        %679 = vmatpush1.bf16.msra.mxu0 0
        %680 = vmatprep.subr.bf16.mxu0 0
        %681 = vmatpush1.bf16.msra.mxu0 0
        %682 = vmatprep.subr.bf16.mxu0 0
        %683 = vmatpush1.bf16.msra.mxu0 0
        %684 = vmatprep.subr.bf16.mxu0 0
        %685 = vmatpush1.bf16.msra.mxu0 0
        %686 = vmatprep.subr.bf16.mxu0 0
        %687 = vmatpush1.bf16.msra.mxu0 0
        %688 = vmatprep.subr.bf16.mxu0 0
        %689 = vmatpush1.bf16.msra.mxu0 0
        %690 = vmatprep.subr.bf16.mxu0 0
        %691 = vmatpush1.bf16.msra.mxu0 0
        %692 = vmatprep.subr.bf16.mxu0 0
        %693 = vmatpush1.bf16.msra.mxu0 0
        %694 = vmatprep.subr.bf16.mxu0 0
        %695 = vmatpush1.bf16.msra.mxu0 0
        %696 = vmatprep.subr.bf16.mxu0 0
        %697 = vmatpush1.bf16.msra.mxu0 0
        %698 = vmatprep.subr.bf16.mxu0 0
        %699 = vmatpush1.bf16.msra.mxu0 0
        %700 = vmatprep.subr.bf16.mxu0 0
        %701 = vmatpush1.bf16.msra.mxu0 0
        %702 = vmatprep.mubr.bf16.mxu0 0
        %703 = vmatmul.mubr.bf16.gmra.mrb[0].mxu0 %v668
        %v704 = vpop.f32.mrb[0].mxu0
        %v705 = vadd.f32 %v653, %v704
        %v706 = vpop.f32.mrb[0].mxu0
        %v707 = vpop.f32.mrb[0].mxu0
        %v708 = vpop.f32.mrb[0].mxu0
        %709 = vdwg.mxu0
        %vm710 = vcmask 64512
        %v711 = vsel %vm710, %v705, -inf
        %712 = vmax.xlane.f32.xlu0 %v711
        %v713 = vpop.xlane.xlu0 %712
        %v714 = vsub.f32 %v705, %v713
        %v715 = vmul.f32 %v714, 1.442695
        %v716 = vpow.pop %v715
        %v717 = vsel %vm710, %v716, 0.0
        %718 = vadd.xlane.f32.xlu0 %v717
        %v719 = vpop.xlane.xlu0 %718
        %v720 = vrcp.pop %v719
        %v721 = vmul.f32 %v716, %v720
        %722 = vst.msk [vmem:[%s503] sm:$0xff] %vm710, %v721
        %v723 = vld [vmem:[%s435] sm:$0xff]
        %v724 = vadd.f32 %v714, %v723
        %v725 = vlaneseq
        %v726 = vand.u32 %v725, 127
        %v727 = vsel %vm710, %v724, -inf
        %728 = vmax.xlane.f32.xlu0 %v727
        %v729 = vpop.xlane.xlu0 %728
        %vm730 = vcmp.ge.f32.partialorder %v724, %v729
        %v731 = vsel %vm730, %v726, 8
        %v732 = vsel %vm710, %v731, 2147483647
        %v733 = vand.u32 %v732, 65535
        %v734 = vshra.s32 %v732, 16
        %v735 = vcvt.s32.f32 %v733
        %v736 = vcvt.s32.f32 %v734
        %737 = vmin.xlane.f32.xlu0 %v736
        %v738 = vpop.xlane.xlu0 %737
        %vm739 = vcmp.eq.f32.partialorder %v736, %v738
        %v740 = vsel %vm739, %v735, inf
        %741 = vmin.xlane.f32.xlu0 %v740
        %v742 = vpop.xlane.xlu0 %741
        %v743 = vcvt.f32.s32 %v742
        %v744 = vcvt.f32.s32 %v738
        %v745 = vshll.u32 %v744, 16
        %v746 = vadd.s32 %v745, %v743
        %vm747 = vcmask 7168
        %748 = vst.msk [vmem:[%s496] sm:$0xff] %vm747, %v746
        %vm749 = vcmp.eq.s32.totalorder %v726, %v746
        %v750 = vsel %vm749, %v714, 0.0
        %v751 = vsel %vm710, %v750, 0.0
        %752 = vadd.xlane.f32.xlu0 %v751
        %v753 = vpop.xlane.xlu0 %752
        %v754 = vlog2.pop %v719
        %v755 = vmul.f32 %v754, 0.6931472
        %v756 = vsub.f32 %v753, %v755
        %757 = vst.msk [vmem:[%s510] sm:$0xff] %vm747, %v756
        %s758 = sand.u32 %s223, 1
        %s759 = scalar_lea.sflag [#allocation4], %s758
        %s760 = sand.u32 %s223, 1
        %s761 = smul.addr %s760, 8
        %s762 = scalar_lea.vmem [#allocation16], %s761
        %s763 = sand.u32 %s37, 1
        %s764 = scalar_lea.sflag [#allocation18], %s763
        %s765 = sand.u32 %s249, 1
        %s766 = smul.addr %s765, 8
        %s767 = scalar_lea.vmem [#allocation17], %s766
        %s768 = sand.u32 %s37, 1
        %s769 = scalar_lea.sflag [#allocation18], %s768
        %s770 = sand.u32 %s275, 1
        %s771 = smul.addr %s770, 8
        %s772 = scalar_lea.vmem [#allocation19], %s771
        // Predicated region
        $region85: #{mlp_gen_policy_forward.1} parent=51 // pred_check
          %p773 = pneg %p233
        $region86: #{mlp_gen_policy_forward.1} parent=51 // pred_check_branch
          %775 = sbr.rel (%p773) target = $region88
        $region87: #{mlp_gen_policy_forward.1} parent=51 // pred_region
          %s777 = ssub.s32 128, 128
          %778 = vsyncadd %s759, %s777
          %s779 = smul.addr %s37, 128
          %s780 = scalar_lea.hbm %s8, %s779
          %s782 = sshll.u32 %s762, 4
          %s783 = int_to_ptr.vmem [resolvable:$true] %s782
          %785 = dma.vmem_to_hbm [thread:$0]  %s783, 128, %s780, %s759
        $region88: #{mlp_gen_policy_forward.1} parent=51 // pred_fallthru
          _
        // Predicated region
        $region89: #{mlp_gen_policy_forward.1} parent=51 // pred_check
          %p786 = pneg %p259
        $region90: #{mlp_gen_policy_forward.1} parent=51 // pred_check_branch
          %788 = sbr.rel (%p786) target = $region92
        $region91: #{mlp_gen_policy_forward.1} parent=51 // pred_region
          %s790 = ssub.s32 128, 128
          %791 = vsyncadd %s764, %s790
          %s792 = smul.addr %s37, 128
          %s793 = scalar_lea.hbm %s9, %s792
          %s795 = sshll.u32 %s767, 4
          %s796 = int_to_ptr.vmem [resolvable:$true] %s795
          %798 = dma.vmem_to_hbm [thread:$0]  %s796, 128, %s793, %s764
        $region92: #{mlp_gen_policy_forward.1} parent=51 // pred_fallthru
          _
        // Predicated region
        $region93: #{mlp_gen_policy_forward.1} parent=51 // pred_check
          %p799 = pneg %p285
        $region94: #{mlp_gen_policy_forward.1} parent=51 // pred_check_branch
          %801 = sbr.rel (%p799) target = $region96
        $region95: #{mlp_gen_policy_forward.1} parent=51 // pred_region
          %s803 = ssub.s32 128, 128
          %804 = vsyncadd %s769, %s803
          %s805 = smul.addr %s37, 128
          %s806 = scalar_lea.hbm %s10, %s805
          %s808 = sshll.u32 %s772, 4
          %s809 = int_to_ptr.vmem [resolvable:$true] %s808
          %811 = dma.vmem_to_hbm [thread:$0]  %s809, 128, %s806, %s769
        $region96: #{mlp_gen_policy_forward.1} parent=51 // pred_fallthru
          _
      $region52: #{mlp_gen_policy_forward.1} parent=5 // pred_fallthru
        _
      %p812 = scmp.le.s32.totalorder 2, %s32
      // Predicated region
      $region97: #{mlp_gen_policy_forward.1} parent=5 // pred_check
        %p813 = pneg %p812
      $region98: #{mlp_gen_policy_forward.1} parent=5 // pred_check_branch
        %815 = sbr.rel (%p813) target = $region100
      $region99: #{mlp_gen_policy_forward.1} parent=5 // pred_region
        %s816 = ssub.s32 %s32, 2
        // Predicated region
        $region101: #{mlp_gen_policy_forward.1} parent=99 // pred_check
          %p817 = pneg %p239
        $region102: #{mlp_gen_policy_forward.1} parent=99 // pred_check_branch
          %819 = sbr.rel (%p817) target = $region104
        $region103: #{mlp_gen_policy_forward.1} parent=99 // pred_region
          %s820 = sand.u32 %s224, 1
          %s821 = scalar_lea.sflag [#allocation4], %s820
          %s822 = sand.u32 %s224, 1
          %s823 = smul.addr %s822, 8
          %s824 = scalar_lea.vmem [#allocation16], %s823
          %825 = dma.done %s821, 128
        $region104: #{mlp_gen_policy_forward.1} parent=99 // pred_fallthru
          _
        // Predicated region
        $region105: #{mlp_gen_policy_forward.1} parent=99 // pred_check
          %p826 = pneg %p265
        $region106: #{mlp_gen_policy_forward.1} parent=99 // pred_check_branch
          %828 = sbr.rel (%p826) target = $region108
        $region107: #{mlp_gen_policy_forward.1} parent=99 // pred_region
          %s829 = sand.u32 %s38, 1
          %s830 = scalar_lea.sflag [#allocation18], %s829
          %s831 = sand.u32 %s250, 1
          %s832 = smul.addr %s831, 8
          %s833 = scalar_lea.vmem [#allocation17], %s832
          %834 = dma.done %s830, 128
        $region108: #{mlp_gen_policy_forward.1} parent=99 // pred_fallthru
          _
        // Predicated region
        $region109: #{mlp_gen_policy_forward.1} parent=99 // pred_check
          %p835 = pneg %p291
        $region110: #{mlp_gen_policy_forward.1} parent=99 // pred_check_branch
          %837 = sbr.rel (%p835) target = $region112
        $region111: #{mlp_gen_policy_forward.1} parent=99 // pred_region
          %s838 = sand.u32 %s38, 1
          %s839 = scalar_lea.sflag [#allocation18], %s838
          %s840 = sand.u32 %s276, 1
          %s841 = smul.addr %s840, 8
          %s842 = scalar_lea.vmem [#allocation19], %s841
          %843 = dma.done %s839, 128
        $region112: #{mlp_gen_policy_forward.1} parent=99 // pred_fallthru
          _
      $region100: #{mlp_gen_policy_forward.1} parent=5 // pred_fallthru
        _
    $region6: #{mlp_gen_policy_forward.1} parent=1 // loop_footer
      %s36 = sadd.s32 1, %s32
    $region7: #{mlp_gen_policy_forward.1} parent=1 // loop_footer_branch
      %31 = sbr.rel target = $region3
    $region8: #{mlp_gen_policy_forward.1} parent=1 // loop_exit
      _
    %844 = vsyncpa [#allocation3], 1
    %s845 = scalar_lea.sflag [#allocation3], 1
    %846 = vsyncpa %s845, 1
    %847 = vsyncpa [#allocation6], 1
    %s848 = scalar_lea.sflag [#allocation6], 1
    %849 = vsyncpa %s848, 1
    %850 = vsyncpa [#allocation9], 1
    %851 = vsyncpa [#allocation12], 1
    %852 = vsyncpa [#allocation15], 1
    %853 = vsyncpa [#allocation4], 1
    %s854 = scalar_lea.sflag [#allocation4], 1
    %855 = vsyncpa %s854, 1
    %856 = vsyncpa [#allocation18], 1
    %s857 = scalar_lea.sflag [#allocation18], 1
    %858 = vsyncpa %s857, 1

</llo_original>
